<compile_context>
chip_gen: v7x
topology: tpu7x:2x2x1
jax: 0.10.0
libtpu: 0.0.40
codegen_flags: <defaults>
</compile_context>

<pallas_src>
import functools

import jax
import jax.numpy as jnp
import numpy as np
from jax.experimental import pallas as pl
from jax.experimental.pallas import tpu as pltpu


# --------------------------------------------------------------------------
# Fused kernel: one K=9*Cin matmul per branch, batch folded into M.
#   x*_ref : (bg, m_b, 9*Cin)  bf16 im2col slab for the batch group
#   w_ref  : (3, 9*Cin, Cout)  bf16
#   b_ref  : (3, Cout)         f32
#   o_ref  : (bg, seq, Cout)   f32
# cfg: per-branch (m_b, seq_offset), static.
# --------------------------------------------------------------------------
def _das_fused_kernel(x1_ref, x2_ref, x4_ref, w_ref, b_ref, o_ref, *, cfg):
    x_refs = (x1_ref, x2_ref, x4_ref)
    for br, (m, off) in enumerate(cfg):
        x_ref = x_refs[br]
        bg = x_ref.shape[0]
        k = x_ref.shape[-1]
        if bg == 1:
            xm = x_ref[0]                                   # (m, K), free squeeze
        else:
            xm = x_ref[...].reshape(bg * m, k)              # free when m % 8 == 0
        # Single MXU contraction (bf16 in, f32 accumulate).
        acc = jnp.dot(xm, w_ref[br], preferred_element_type=jnp.float32)
        acc = acc + b_ref[br:br + 1, :]                     # (1, Cout) broadcast
        if bg == 1:
            o_ref[0, off:off + m, :] = acc.astype(o_ref.dtype)
        else:
            o_ref[:, off:off + m, :] = acc.reshape(bg, m, -1).astype(o_ref.dtype)


# --------------------------------------------------------------------------
# DepthAwareSample forward
# --------------------------------------------------------------------------
def depth_aware_sample(x_nchw, params, num_output_channel):
    """x_nchw: (B, Cin, H, W).  params: w1/w2/w4 HWIO (3,3,Cin,Cout), b1/b2/b4 (Cout,)."""
    B, Cin, H, W = x_nchw.shape
    Cout = params["w1"].shape[-1]
    # The module slices stride-2 rows 7:9 and stride-4 rows 4:8, which only
    # exist (with the same semantics as the PyTorch reference) for H >= 29.
    assert H >= 29, "DepthAwareSample requires H >= 29"

    # Only input rows 5..29 are ever consumed (25 rows). Slice BEFORE the
    # transpose / cast so the full frame never round-trips HBM.
    x_win = x_nchw[:, :, 5:30, :]                           # (B, Cin, <=25, W)
    if x_win.shape[2] < 25:                                 # H == 29: conv bottom zero pad
        x_win = jnp.pad(x_win, ((0, 0), (0, 0), (0, 25 - x_win.shape[2]), (0, 0)))
    xw = jnp.transpose(x_win, (0, 2, 3, 1)).astype(jnp.bfloat16)   # (B, 25, W, Cin)
    xw = jnp.pad(xw, ((0, 0), (0, 0), (1, 1), (0, 0)))      # 1px width zero pad

    W2 = (W - 1) // 2 + 1            # stride-2 conv output width (k=3, pad=1)
    W4 = (W - 1) // 4 + 1            # stride-4 conv output width
    seq = 8 * W + 2 * W2 + 4 * W4
    K = 9 * Cin

    # Consumed output rows per branch mapped to window rows (window row 0 ==
    # absolute input row 5):
    #   stride-1 rows 6:14 -> centers 6..13  -> window rows 0..9
    #   stride-2 rows 7:9  -> centers 14,16  -> window rows 8..12
    #   stride-4 rows 4:8  -> centers 16..28 -> window rows 10..24
    # (n_out_rows, stride, out_width, first_window_row, seq_offset)
    branches = (
        (8, 1, W,  0, 0),
        (2, 2, W2, 8, 8 * W),
        (4, 4, W4, 10, 8 * W + 2 * W2),
    )

    def im2col(n_r, s, wout, r0):
        # (kh, kw, cin)-ordered channel concat to match HWIO weight flattening.
        taps = []
        for kh in range(3):
            for kw in range(3):
                taps.append(xw[:, r0 + kh: r0 + kh + s * (n_r - 1) + 1: s,
                               kw: kw + s * (wout - 1) + 1: s, :])
        t = jnp.concatenate(taps, axis=-1)                  # (B, n_r, wout, 9*Cin)
        return t.reshape(B, n_r * wout, K)

    xb = [im2col(nr, s, wo, r0) for (nr, s, wo, r0, off) in branches]

    # Weights: HWIO (3,3,Cin,Cout) -> (9*Cin, Cout); stack branches.
    w_stack = jnp.stack([params["w1"].reshape(K, Cout),
                         params["w2"].reshape(K, Cout),
                         params["w4"].reshape(K, Cout)]).astype(jnp.bfloat16)
    b_stack = jnp.stack([params["b1"], params["b2"],
                         params["b4"]]).astype(jnp.float32)

    # Grid: 2-way parallel batch split when possible (feeds both v7x TCs,
    # only 2 pipeline steps on single-TC v5e/v6e); batch folds into M.
    G = 2 if (B >= 2 and B % 2 == 0) else 1
    bg = B // G

    cfg = tuple((nr * wo, off) for (nr, s, wo, r0, off) in branches)
    kernel = functools.partial(_das_fused_kernel, cfg=cfg)

    out = pl.pallas_call(
        kernel,
        out_shape=jax.ShapeDtypeStruct((B, seq, Cout), jnp.float32),
        grid=(G,),
        in_specs=[
            pl.BlockSpec((bg,) + xb[0].shape[1:], lambda g: (g, 0, 0)),
            pl.BlockSpec((bg,) + xb[1].shape[1:], lambda g: (g, 0, 0)),
            pl.BlockSpec((bg,) + xb[2].shape[1:], lambda g: (g, 0, 0)),
            pl.BlockSpec(w_stack.shape, lambda g: (0, 0, 0)),
            pl.BlockSpec(b_stack.shape, lambda g: (0, 0)),
        ],
        out_specs=pl.BlockSpec((bg, seq, Cout), lambda g: (g, 0, 0)),
        compiler_params=pltpu.CompilerParams(
            dimension_semantics=("parallel",)),
    )(xb[0], xb[1], xb[2], w_stack, b_stack)

    # The module views each branch as (b, -1, num_output_channel) and concats
    # on dim 1; the slab is already in that memory order -> one free reshape.
    return out.reshape(B, -1, num_output_channel)


# --------------------------------------------------------------------------
# Pure-JAX reference (mirrors the PyTorch forward, NCHW convs, f32)
# --------------------------------------------------------------------------
def depth_aware_sample_ref(x_nchw, params, num_output_channel):
    def conv(x, w, bias, stride):
        out = jax.lax.conv_general_dilated(
            x, w, window_strides=(stride, stride),
            padding=((1, 1), (1, 1)),
            dimension_numbers=("NCHW", "HWIO", "NCHW"),
            precision=jax.lax.Precision.HIGHEST)
        return out + bias.reshape(1, -1, 1, 1)

    b = x_nchw.shape[0]
    f8 = conv(x_nchw, params["w1"], params["b1"], 1)[:, :, 6:14, :]
    f16 = conv(x_nchw, params["w2"], params["b2"], 2)[:, :, 7:9, :]
    f32b = conv(x_nchw, params["w4"], params["b4"], 4)[:, :, 4:8, :]

    def flat(f):
        return jnp.transpose(f, (0, 2, 3, 1)).reshape(b, -1, num_output_channel)

    return jnp.concatenate([flat(f8), flat(f16), flat(f32b)], axis=1)


# --------------------------------------------------------------------------
if __name__ == "__main__":
    # H must be >= 29 so the stride-2 rows 7:9 and stride-4 rows 4:8 exist.
    B, Cin, H, W = 2, 16, 32, 32
    Cout = 16                      # num_feats_out
    num_output_channel = 16        # == num_feats_out -> clean (b, -1, C) view

    key = jax.random.PRNGKey(0)
    k_x, k1, k2, k3, kb1, kb2, kb3 = jax.random.split(key, 7)

    x = jax.random.normal(k_x, (B, Cin, H, W), dtype=jnp.float32)

    # The original module fills weights/biases with 0 (output would be all-zero);
    # use deterministic random params instead so the kernel does real compute.
    scale = 0.1
    params = {
        "w1": scale * jax.random.normal(k1, (3, 3, Cin, Cout), jnp.float32),
        "w2": scale * jax.random.normal(k2, (3, 3, Cin, Cout), jnp.float32),
        "w4": scale * jax.random.normal(k3, (3, 3, Cin, Cout), jnp.float32),
        "b1": scale * jax.random.normal(kb1, (Cout,), jnp.float32),
        "b2": scale * jax.random.normal(kb2, (Cout,), jnp.float32),
        "b4": scale * jax.random.normal(kb3, (Cout,), jnp.float32),
    }

    out = jax.block_until_ready(depth_aware_sample(x, params, num_output_channel))
    ref = jax.block_until_ready(depth_aware_sample_ref(x, params, num_output_channel))

    # Expected sequence length: 8*W + 2*ceil(W/2) + 4*ceil(W/4) = 320 for W=32.
    W2 = (W - 1) // 2 + 1
    W4 = (W - 1) // 4 + 1
    expected_seq = (8 * W + 2 * W2 + 4 * W4) * Cout // num_output_channel
    assert out.shape == (B, expected_seq, num_output_channel), out.shape
    assert ref.shape == out.shape, (ref.shape, out.shape)

    # Kernel runs the MXU in bf16 (f32 accumulate); compare against the f32
    # HIGHEST-precision reference with a correspondingly loosened tolerance.
    np.testing.assert_allclose(np.asarray(out), np.asarray(ref),
                               rtol=5e-2, atol=5e-2)

    print("KERNEL_OK")
</pallas_src>

<mosaic_0001>
module attributes {stable_mosaic.version = 11 : i64} {
  func.func @_das_fused_kernel(%arg0: i32, %arg1: memref<1x256x144xbf16, #tpu.memory_space<vmem>>, %arg2: memref<1x32x144xbf16, #tpu.memory_space<vmem>>, %arg3: memref<1x32x144xbf16, #tpu.memory_space<vmem>>, %arg4: memref<3x144x16xbf16, #tpu.memory_space<vmem>>, %arg5: memref<3x16xf32, #tpu.memory_space<vmem>>, %arg6: memref<1x320x16xf32, #tpu.memory_space<vmem>>) attributes {dimension_semantics = [#tpu.dimension_semantics<parallel>], iteration_bounds = array<i64: 2>, scalar_prefetch = 0 : i64, scratch_operands = 0 : i64, tpu.core_type = #tpu.core_type<tc>, window_params = [{transform_indices = @transform_0, window_bounds = array<i64: 1, 256, 144>}, {transform_indices = @transform_1, window_bounds = array<i64: 1, 32, 144>}, {transform_indices = @transform_2, window_bounds = array<i64: 1, 32, 144>}, {pipeline_mode = #tpu.pipeline_mode<synchronous>, transform_indices = @transform_3, window_bounds = array<i64: 3, 144, 16>}, {pipeline_mode = #tpu.pipeline_mode<synchronous>, transform_indices = @transform_4, window_bounds = array<i64: 3, 16>}, {transform_indices = @transform_5, window_bounds = array<i64: 1, 320, 16>}]} {
    %c0 = arith.constant 0 : index
    %c0_0 = arith.constant 0 : index
    %c0_1 = arith.constant 0 : index
    %0 = vector.load %arg1[%c0, %c0_0, %c0_1] : memref<1x256x144xbf16, #tpu.memory_space<vmem>>, vector<1x256x144xbf16>
    %1 = vector.shape_cast %0 : vector<1x256x144xbf16> to vector<256x144xbf16>
    %c0_2 = arith.constant 0 : index
    %c0_3 = arith.constant 0 : index
    %c0_4 = arith.constant 0 : index
    %2 = vector.load %arg4[%c0_2, %c0_3, %c0_4] : memref<3x144x16xbf16, #tpu.memory_space<vmem>>, vector<1x144x16xbf16>
    %3 = vector.shape_cast %2 : vector<1x144x16xbf16> to vector<144x16xbf16>
    %cst = arith.constant dense<0.000000e+00> : vector<256x16xf32>
    %4 = tpu.matmul %1, %3, %cst {dimension_numbers = #tpu.dot_dimension_numbers<[1], [0], [0], [1], [0, 0, 1, 1], [], []>} : vector<256x144xbf16>, vector<144x16xbf16>, vector<256x16xf32> -> vector<256x16xf32>
    %c0_5 = arith.constant 0 : index
    %c0_6 = arith.constant 0 : index
    %5 = vector.load %arg5[%c0_5, %c0_6] : memref<3x16xf32, #tpu.memory_space<vmem>>, vector<1x16xf32>
    %6 = vector.broadcast %5 : vector<1x16xf32> to vector<256x16xf32>
    %7 = arith.addf %4, %6 : vector<256x16xf32>
    %c0_7 = arith.constant 0 : index
    %c0_8 = arith.constant 0 : index
    %c0_9 = arith.constant 0 : index
    %8 = vector.load %arg6[%c0_7, %c0_8, %c0_9] : memref<1x320x16xf32, #tpu.memory_space<vmem>>, vector<1x256x16xf32>
    %9 = vector.shape_cast %8 : vector<1x256x16xf32> to vector<256x16xf32>
    %10 = vector.shape_cast %7 : vector<256x16xf32> to vector<1x256x16xf32>
    tpu.vector_store %arg6[%c0_7, %c0_8, %c0_9], %10 {strides = array<i32>} : memref<1x320x16xf32, #tpu.memory_space<vmem>>, vector<1x256x16xf32>,
    %c0_10 = arith.constant 0 : index
    %c0_11 = arith.constant 0 : index
    %c0_12 = arith.constant 0 : index
    %11 = vector.load %arg2[%c0_10, %c0_11, %c0_12] : memref<1x32x144xbf16, #tpu.memory_space<vmem>>, vector<1x32x144xbf16>
    %12 = vector.shape_cast %11 : vector<1x32x144xbf16> to vector<32x144xbf16>
    %c1 = arith.constant 1 : index
    %c0_13 = arith.constant 0 : index
    %c0_14 = arith.constant 0 : index
    %13 = vector.load %arg4[%c1, %c0_13, %c0_14] : memref<3x144x16xbf16, #tpu.memory_space<vmem>>, vector<1x144x16xbf16>
    %14 = vector.shape_cast %13 : vector<1x144x16xbf16> to vector<144x16xbf16>
    %cst_15 = arith.constant dense<0.000000e+00> : vector<32x16xf32>
    %15 = tpu.matmul %12, %14, %cst_15 {dimension_numbers = #tpu.dot_dimension_numbers<[1], [0], [0], [1], [0, 0, 1, 1], [], []>} : vector<32x144xbf16>, vector<144x16xbf16>, vector<32x16xf32> -> vector<32x16xf32>
    %c1_16 = arith.constant 1 : index
    %c0_17 = arith.constant 0 : index
    %16 = vector.load %arg5[%c1_16, %c0_17] : memref<3x16xf32, #tpu.memory_space<vmem>>, vector<1x16xf32>
    %17 = vector.broadcast %16 : vector<1x16xf32> to vector<32x16xf32>
    %18 = arith.addf %15, %17 : vector<32x16xf32>
    %c0_18 = arith.constant 0 : index
    %c256 = arith.constant 256 : index
    %c0_19 = arith.constant 0 : index
    %19 = vector.load %arg6[%c0_18, %c256, %c0_19] : memref<1x320x16xf32, #tpu.memory_space<vmem>>, vector<1x32x16xf32>
    %20 = vector.shape_cast %19 : vector<1x32x16xf32> to vector<32x16xf32>
    %21 = vector.shape_cast %18 : vector<32x16xf32> to vector<1x32x16xf32>
    tpu.vector_store %arg6[%c0_18, %c256, %c0_19], %21 {strides = array<i32>} : memref<1x320x16xf32, #tpu.memory_space<vmem>>, vector<1x32x16xf32>,
    %c0_20 = arith.constant 0 : index
    %c0_21 = arith.constant 0 : index
    %c0_22 = arith.constant 0 : index
    %22 = vector.load %arg3[%c0_20, %c0_21, %c0_22] : memref<1x32x144xbf16, #tpu.memory_space<vmem>>, vector<1x32x144xbf16>
    %23 = vector.shape_cast %22 : vector<1x32x144xbf16> to vector<32x144xbf16>
    %c2 = arith.constant 2 : index
    %c0_23 = arith.constant 0 : index
    %c0_24 = arith.constant 0 : index
    %24 = vector.load %arg4[%c2, %c0_23, %c0_24] : memref<3x144x16xbf16, #tpu.memory_space<vmem>>, vector<1x144x16xbf16>
    %25 = vector.shape_cast %24 : vector<1x144x16xbf16> to vector<144x16xbf16>
    %cst_25 = arith.constant dense<0.000000e+00> : vector<32x16xf32>
    %26 = tpu.matmul %23, %25, %cst_25 {dimension_numbers = #tpu.dot_dimension_numbers<[1], [0], [0], [1], [0, 0, 1, 1], [], []>} : vector<32x144xbf16>, vector<144x16xbf16>, vector<32x16xf32> -> vector<32x16xf32>
    %c2_26 = arith.constant 2 : index
    %c0_27 = arith.constant 0 : index
    %27 = vector.load %arg5[%c2_26, %c0_27] : memref<3x16xf32, #tpu.memory_space<vmem>>, vector<1x16xf32>
    %28 = vector.broadcast %27 : vector<1x16xf32> to vector<32x16xf32>
    %29 = arith.addf %26, %28 : vector<32x16xf32>
    %c0_28 = arith.constant 0 : index
    %c288 = arith.constant 288 : index
    %c0_29 = arith.constant 0 : index
    %30 = vector.load %arg6[%c0_28, %c288, %c0_29] : memref<1x320x16xf32, #tpu.memory_space<vmem>>, vector<1x32x16xf32>
    %31 = vector.shape_cast %30 : vector<1x32x16xf32> to vector<32x16xf32>
    %32 = vector.shape_cast %29 : vector<32x16xf32> to vector<1x32x16xf32>
    tpu.vector_store %arg6[%c0_28, %c288, %c0_29], %32 {strides = array<i32>} : memref<1x320x16xf32, #tpu.memory_space<vmem>>, vector<1x32x16xf32>,
    return
  }
  func.func @transform_0(%arg0: i32) -> (i32, i32, i32) {
    %c0_i32 = arith.constant 0 : i32
    %c0_i32_0 = arith.constant 0 : i32
    %c0_i32_1 = arith.constant 0 : i32
    return %arg0, %c0_i32, %c0_i32_0 : i32, i32, i32
  }
  func.func @transform_1(%arg0: i32) -> (i32, i32, i32) {
    %c0_i32 = arith.constant 0 : i32
    %c0_i32_0 = arith.constant 0 : i32
    %c0_i32_1 = arith.constant 0 : i32
    return %arg0, %c0_i32, %c0_i32_0 : i32, i32, i32
  }
  func.func @transform_2(%arg0: i32) -> (i32, i32, i32) {
    %c0_i32 = arith.constant 0 : i32
    %c0_i32_0 = arith.constant 0 : i32
    %c0_i32_1 = arith.constant 0 : i32
    return %arg0, %c0_i32, %c0_i32_0 : i32, i32, i32
  }
  func.func @transform_3(%arg0: i32) -> (i32, i32, i32) {
    %c0_i32 = arith.constant 0 : i32
    %c0_i32_0 = arith.constant 0 : i32
    %c0_i32_1 = arith.constant 0 : i32
    %c0_i32_2 = arith.constant 0 : i32
    return %c0_i32, %c0_i32_0, %c0_i32_1 : i32, i32, i32
  }
  func.func @transform_4(%arg0: i32) -> (i32, i32) {
    %c0_i32 = arith.constant 0 : i32
    %c0_i32_0 = arith.constant 0 : i32
    %c0_i32_1 = arith.constant 0 : i32
    return %c0_i32, %c0_i32_0 : i32, i32
  }
  func.func @transform_5(%arg0: i32) -> (i32, i32, i32) {
    %c0_i32 = arith.constant 0 : i32
    %c0_i32_0 = arith.constant 0 : i32
    %c0_i32_1 = arith.constant 0 : i32
    return %arg0, %c0_i32, %c0_i32_0 : i32, i32, i32
  }
}

</mosaic_0001>

<llo_original>
// kernel: tpu_custom_call.1
$region0: #{tpu_custom_call.1}
  #allocation0 [shape = 'u32[]', space=smem, size = 0x4, offset = 0x4, fixed_abs, tag = 'smem constant byte address 0x4 - core index']
  #allocation1 [shape = 'u32[144,128]{1,0:T(1,128)}', space=vmem, size = 0x12000, scoped, tag = 'internal scratch']
  %s0 = inlined_call_operand.vmem [shape: bf16[2,256,144], index: 0, kind: input, shape index: {}]
  %s1 = inlined_call_operand.vmem [shape: bf16[2,32,144], index: 1, kind: input, shape index: {}]
  %s2 = inlined_call_operand.vmem [shape: bf16[2,32,144], index: 2, kind: input, shape index: {}]
  %s3 = inlined_call_operand.vmem [shape: bf16[3,144,16], index: 3, kind: input, shape index: {}]
  %s4 = inlined_call_operand.vmem [shape: f32[3,16], index: 4, kind: input, shape index: {}]
  %s5 = inlined_call_operand.vmem [shape: f32[2,320,16], index: 5, kind: output, shape index: {}]
  %s6 = sld [smem:[#allocation0]]
  $region53: #{tpu_custom_call.1} parent=0
    _
  %s8 = ssub.s32 1, %s6
  %s9 = scalar_select 0, %s8, %s6
  loop: start=0, step=1, limit=4
  $region2: #{tpu_custom_call.1} parent=0 // loop_pre_header
    _
  $region3: #{tpu_custom_call.1} parent=0 // loop_header
    %s11 = sphi 0, %s15
    %p12 = scmp.ge.s32.totalorder %s11, 4
    %s21 = sphi 0, %s23
    %s24 = sphi 0, %s21
    %s25 = sphi 0, %s24
    %s41 = sphi 0, %s25
    %s47 = sphi 0, %s49
    %s50 = sphi 0, %s47
    %s51 = sphi 0, %s50
    %s67 = sphi 0, %s51
    %s73 = sphi 0, %s75
    %s76 = sphi 0, %s73
    %s77 = sphi 0, %s76
    %s93 = sphi 0, %s77
    %s97 = sphi 0, %s97
    %s99 = sphi 0, %s97
    %s100 = sphi 0, %s99
    %s114 = sphi 0, %s100
    %s118 = sphi 0, %s118
    %s120 = sphi 0, %s118
    %s121 = sphi 0, %s120
    %s135 = sphi 0, %s121
    %s141 = sphi 0, %s143
    %s144 = sphi 0, %s141
    %s145 = sphi 0, %s144
    %s161 = sphi 0, %s145
  $region4: #{tpu_custom_call.1} parent=0 // loop_header_branch
    %14 = sbr.rel (%p12) target = $region8
  $region5: #{tpu_custom_call.1} parent=0 // loop_body
    %s16 = ssub.s32 %s11, 1
    %s17 = ssub.s32 %s11, 2
    %s18 = sadd.s32 %s11, 1
    %s19 = ssub.s32 %s11, %s18
    %p20 = scmp.eq.s32.totalorder %s19, 0
    %s22 = sadd.s32 %s21, 1
    %s23 = scalar_select %p20, %s21, %s22
    %p26 = pneg %p20
    %p27 = scmp.eq.s32.totalorder %s11, 1
    %p28 = por %p26, %p27
    %p29 = scmp.ne.s32.totalorder %s21, %s24
    %p30 = scmp.eq.s32.totalorder %s11, 0
    %p31 = por %p29, %p30
    %p32 = scmp.ne.s32.totalorder %s21, %s24
    %p33 = scmp.eq.s32.totalorder %s16, 1
    %p34 = por %p32, %p33
    %p35 = scmp.ne.s32.totalorder %s24, %s25
    %p36 = scmp.eq.s32.totalorder %s16, 0
    %p37 = por %p35, %p36
    %p38 = scmp.ne.s32.totalorder %s24, %s25
    %p39 = scmp.eq.s32.totalorder %s17, 1
    %p40 = por %p38, %p39
    %p42 = scmp.ne.s32.totalorder %s25, %s41
    %p43 = scmp.eq.s32.totalorder %s17, 0
    %p44 = por %p42, %p43
    %s45 = ssub.s32 %s11, %s18
    %p46 = scmp.eq.s32.totalorder %s45, 0
    %s48 = sadd.s32 %s47, 1
    %s49 = scalar_select %p46, %s47, %s48
    %p52 = pneg %p46
    %p53 = scmp.eq.s32.totalorder %s11, 1
    %p54 = por %p52, %p53
    %p55 = scmp.ne.s32.totalorder %s47, %s50
    %p56 = scmp.eq.s32.totalorder %s11, 0
    %p57 = por %p55, %p56
    %p58 = scmp.ne.s32.totalorder %s47, %s50
    %p59 = scmp.eq.s32.totalorder %s16, 1
    %p60 = por %p58, %p59
    %p61 = scmp.ne.s32.totalorder %s50, %s51
    %p62 = scmp.eq.s32.totalorder %s16, 0
    %p63 = por %p61, %p62
    %p64 = scmp.ne.s32.totalorder %s50, %s51
    %p65 = scmp.eq.s32.totalorder %s17, 1
    %p66 = por %p64, %p65
    %p68 = scmp.ne.s32.totalorder %s51, %s67
    %p69 = scmp.eq.s32.totalorder %s17, 0
    %p70 = por %p68, %p69
    %s71 = ssub.s32 %s11, %s18
    %p72 = scmp.eq.s32.totalorder %s71, 0
    %s74 = sadd.s32 %s73, 1
    %s75 = scalar_select %p72, %s73, %s74
    %p78 = pneg %p72
    %p79 = scmp.eq.s32.totalorder %s11, 1
    %p80 = por %p78, %p79
    %p81 = scmp.ne.s32.totalorder %s73, %s76
    %p82 = scmp.eq.s32.totalorder %s11, 0
    %p83 = por %p81, %p82
    %p84 = scmp.ne.s32.totalorder %s73, %s76
    %p85 = scmp.eq.s32.totalorder %s16, 1
    %p86 = por %p84, %p85
    %p87 = scmp.ne.s32.totalorder %s76, %s77
    %p88 = scmp.eq.s32.totalorder %s16, 0
    %p89 = por %p87, %p88
    %p90 = scmp.ne.s32.totalorder %s76, %s77
    %p91 = scmp.eq.s32.totalorder %s17, 1
    %p92 = por %p90, %p91
    %p94 = scmp.ne.s32.totalorder %s77, %s93
    %p95 = scmp.eq.s32.totalorder %s17, 0
    %p96 = por %p94, %p95
    %s98 = sadd.s32 %s97, 1
    %p101 = scmp.eq.s32.totalorder %s11, 1
    %p102 = scmp.ne.s32.totalorder %s97, %s99
    %p103 = scmp.eq.s32.totalorder %s11, 0
    %p104 = por %p102, %p103
    %p105 = scmp.ne.s32.totalorder %s97, %s99
    %p106 = scmp.eq.s32.totalorder %s16, 1
    %p107 = por %p105, %p106
    %p108 = scmp.ne.s32.totalorder %s99, %s100
    %p109 = scmp.eq.s32.totalorder %s16, 0
    %p110 = por %p108, %p109
    %p111 = scmp.ne.s32.totalorder %s99, %s100
    %p112 = scmp.eq.s32.totalorder %s17, 1
    %p113 = por %p111, %p112
    %p115 = scmp.ne.s32.totalorder %s100, %s114
    %p116 = scmp.eq.s32.totalorder %s17, 0
    %p117 = por %p115, %p116
    %s119 = sadd.s32 %s118, 1
    %p122 = scmp.eq.s32.totalorder %s11, 1
    %p123 = scmp.ne.s32.totalorder %s118, %s120
    %p124 = scmp.eq.s32.totalorder %s11, 0
    %p125 = por %p123, %p124
    %p126 = scmp.ne.s32.totalorder %s118, %s120
    %p127 = scmp.eq.s32.totalorder %s16, 1
    %p128 = por %p126, %p127
    %p129 = scmp.ne.s32.totalorder %s120, %s121
    %p130 = scmp.eq.s32.totalorder %s16, 0
    %p131 = por %p129, %p130
    %p132 = scmp.ne.s32.totalorder %s120, %s121
    %p133 = scmp.eq.s32.totalorder %s17, 1
    %p134 = por %p132, %p133
    %p136 = scmp.ne.s32.totalorder %s121, %s135
    %p137 = scmp.eq.s32.totalorder %s17, 0
    %p138 = por %p136, %p137
    %s139 = ssub.s32 %s11, %s18
    %p140 = scmp.eq.s32.totalorder %s139, 0
    %s142 = sadd.s32 %s141, 1
    %s143 = scalar_select %p140, %s141, %s142
    %p146 = pneg %p140
    %p147 = scmp.eq.s32.totalorder %s11, 1
    %p148 = por %p146, %p147
    %p149 = scmp.ne.s32.totalorder %s141, %s144
    %p150 = scmp.eq.s32.totalorder %s11, 0
    %p151 = por %p149, %p150
    %p152 = scmp.ne.s32.totalorder %s141, %s144
    %p153 = scmp.eq.s32.totalorder %s16, 1
    %p154 = por %p152, %p153
    %p155 = scmp.ne.s32.totalorder %s144, %s145
    %p156 = scmp.eq.s32.totalorder %s16, 0
    %p157 = por %p155, %p156
    %p158 = scmp.ne.s32.totalorder %s144, %s145
    %p159 = scmp.eq.s32.totalorder %s17, 1
    %p160 = por %p158, %p159
    %p162 = scmp.ne.s32.totalorder %s145, %s161
    %p163 = scmp.eq.s32.totalorder %s17, 0
    %p164 = por %p162, %p163
    %p165 = scmp.le.s32.totalorder 1, %s11
    %p166 = scmp.lt.s32.totalorder %s11, 3
    %p167 = pnand %p165, %p166
    %p168 = pneg %p167
    // Predicated region
    $region9: #{tpu_custom_call.1} parent=5 // pred_check
      _
    $region10: #{tpu_custom_call.1} parent=5 // pred_check_branch
      %170 = sbr.rel (%p167) target = $region12
    $region11: #{tpu_custom_call.1} parent=5 // pred_region
      %s171 = ssub.s32 %s11, 1
      // Predicated region
      $region13: #{tpu_custom_call.1} parent=11 // pred_check
        %p172 = pneg %p110
      $region14: #{tpu_custom_call.1} parent=11 // pred_check_branch
        %174 = sbr.rel (%p172) target = $region16
      $region15: #{tpu_custom_call.1} parent=11 // pred_region
        _
      $region16: #{tpu_custom_call.1} parent=11 // pred_fallthru
        _
      // Predicated region
      $region17: #{tpu_custom_call.1} parent=11 // pred_check
        %p175 = pneg %p131
      $region18: #{tpu_custom_call.1} parent=11 // pred_check_branch
        %177 = sbr.rel (%p175) target = $region20
      $region19: #{tpu_custom_call.1} parent=11 // pred_region
        _
      $region20: #{tpu_custom_call.1} parent=11 // pred_fallthru
        _
    $region12: #{tpu_custom_call.1} parent=5 // pred_fallthru
      _
    %p178 = scmp.lt.s32.totalorder %s11, 2
    // Predicated region
    $region21: #{tpu_custom_call.1} parent=5 // pred_check
      %p179 = pneg %p178
    $region22: #{tpu_custom_call.1} parent=5 // pred_check_branch
      %181 = sbr.rel (%p179) target = $region24
    $region23: #{tpu_custom_call.1} parent=5 // pred_region
      // Predicated region
      $region25: #{tpu_custom_call.1} parent=23 // pred_check
        %p182 = pneg %p31
      $region26: #{tpu_custom_call.1} parent=23 // pred_check_branch
        %184 = sbr.rel (%p182) target = $region28
      $region27: #{tpu_custom_call.1} parent=23 // pred_region
        %p185 = scmp.lt.s32.totalorder %s11, 1
        %s186 = scalar_select %p185, %s11, 1
        %s187 = smul.addr %s186, 64
        %s188 = smul.addr %s187, 4
        %s189 = scalar_lea.vmem %s0, %s188
      $region28: #{tpu_custom_call.1} parent=23 // pred_fallthru
        _
      // Predicated region
      $region29: #{tpu_custom_call.1} parent=23 // pred_check
        %p190 = pneg %p57
      $region30: #{tpu_custom_call.1} parent=23 // pred_check_branch
        %192 = sbr.rel (%p190) target = $region32
      $region31: #{tpu_custom_call.1} parent=23 // pred_region
        %p193 = scmp.lt.s32.totalorder %s11, 1
        %s194 = scalar_select %p193, %s11, 1
        %s195 = smul.addr %s194, 8
        %s196 = smul.addr %s195, 4
        %s197 = scalar_lea.vmem %s1, %s196
      $region32: #{tpu_custom_call.1} parent=23 // pred_fallthru
        _
      // Predicated region
      $region33: #{tpu_custom_call.1} parent=23 // pred_check
        %p198 = pneg %p83
      $region34: #{tpu_custom_call.1} parent=23 // pred_check_branch
        %200 = sbr.rel (%p198) target = $region36
      $region35: #{tpu_custom_call.1} parent=23 // pred_region
        %p201 = scmp.lt.s32.totalorder %s11, 1
        %s202 = scalar_select %p201, %s11, 1
        %s203 = smul.addr %s202, 8
        %s204 = smul.addr %s203, 4
        %s205 = scalar_lea.vmem %s2, %s204
      $region36: #{tpu_custom_call.1} parent=23 // pred_fallthru
        _
    $region24: #{tpu_custom_call.1} parent=5 // pred_fallthru
      _
    %p206 = scmp.le.s32.totalorder 1, %s11
    %p207 = scmp.lt.s32.totalorder %s11, 3
    %p208 = pnand %p206, %p207
    %p209 = pneg %p208
    // Predicated region
    $region37: #{tpu_custom_call.1} parent=5 // pred_check
      _
    $region38: #{tpu_custom_call.1} parent=5 // pred_check_branch
      %211 = sbr.rel (%p208) target = $region40
    $region39: #{tpu_custom_call.1} parent=5 // pred_region
      %s212 = ssub.s32 %s11, 1
      %p213 = scmp.lt.s32.totalorder %s16, 1
      %s214 = scalar_select %p213, %s16, 1
      %s215 = smul.addr %s214, 64
      %s216 = smul.addr %s215, 4
      %s217 = scalar_lea.vmem %s0, %s216
      %p218 = pneg %p37
      %p219 = pneg %p34
      %p220 = scmp.lt.s32.totalorder %s16, 1
      %s221 = scalar_select %p220, %s16, 1
      %s222 = smul.addr %s221, 8
      %s223 = smul.addr %s222, 4
      %s224 = scalar_lea.vmem %s1, %s223
      %p225 = pneg %p63
      %p226 = pneg %p60
      %p227 = scmp.lt.s32.totalorder %s16, 1
      %s228 = scalar_select %p227, %s16, 1
      %s229 = smul.addr %s228, 8
      %s230 = smul.addr %s229, 4
      %s231 = scalar_lea.vmem %s2, %s230
      %p232 = pneg %p89
      %p233 = pneg %p86
      %p234 = pneg %p110
      %p235 = pneg %p107
      %p236 = pneg %p131
      %p237 = pneg %p128
      %p238 = pneg %p157
      %p239 = pneg %p154
      %p240 = scmp.lt.s32.totalorder %s16, 1
      %s241 = scalar_select %p240, %s16, 1
      %s242 = smul.addr %s241, 40
      %s243 = smul.addr %s242, 8
      %s244 = scalar_lea.vmem %s5, %s243
      %p245 = scmp.lt.s32.totalorder %s16, 1
      %s246 = scalar_select %p245, %s16, 1
      %s247 = smul.addr %s246, 64
      %s248 = smul.addr %s247, 4
      %s249 = scalar_lea.vmem %s0, %s248
      %p250 = scmp.lt.s32.totalorder %s16, 1
      %s251 = scalar_select %p250, %s16, 1
      %s252 = smul.addr %s251, 8
      %s253 = smul.addr %s252, 4
      %s254 = scalar_lea.vmem %s1, %s253
      %p255 = scmp.lt.s32.totalorder %s16, 1
      %s256 = scalar_select %p255, %s16, 1
      %s257 = smul.addr %s256, 8
      %s258 = smul.addr %s257, 4
      %s259 = scalar_lea.vmem %s2, %s258
      %p260 = scmp.lt.s32.totalorder %s16, 1
      %s261 = scalar_select %p260, %s16, 1
      %s262 = smul.addr %s261, 40
      %s263 = smul.addr %s262, 8
      %s264 = scalar_lea.vmem %s5, %s263
      %v266 = vld [vmem:[%s249] sm:$0xff]
      %v267 = vld [vmem:[%s249 + $0x8] sm:$0xff]
      %v268 = vld [vmem:[%s249 + $0x10] sm:$0xff]
      %v269 = vld [vmem:[%s249 + $0x18] sm:$0xff]
      %v270 = vld [vmem:[%s249 + $0x20] sm:$0xff]
      %v271 = vld [vmem:[%s249 + $0x28] sm:$0xff]
      %v272 = vld [vmem:[%s249 + $0x30] sm:$0xff]
      %v273 = vld [vmem:[%s249 + $0x38] sm:$0xff]
      %v274 = vld [vmem:[%s249 + $0x40] sm:$0xff]
      %v275 = vld [vmem:[%s249 + $0x48] sm:$0xff]
      %v276 = vld [vmem:[%s249 + $0x50] sm:$0xff]
      %v277 = vld [vmem:[%s249 + $0x58] sm:$0xff]
      %v278 = vld [vmem:[%s249 + $0x60] sm:$0xff]
      %v279 = vld [vmem:[%s249 + $0x68] sm:$0xff]
      %v280 = vld [vmem:[%s249 + $0x70] sm:$0xff]
      %v281 = vld [vmem:[%s249 + $0x78] sm:$0xff]
      %v282 = vld [vmem:[%s249 + $0x80] sm:$0xff]
      %v283 = vld [vmem:[%s249 + $0x88] sm:$0xff]
      %v284 = vld [vmem:[%s249 + $0x90] sm:$0xff]
      %v285 = vld [vmem:[%s249 + $0x98] sm:$0xff]
      %v286 = vld [vmem:[%s249 + $0xa0] sm:$0xff]
      %v287 = vld [vmem:[%s249 + $0xa8] sm:$0xff]
      %v288 = vld [vmem:[%s249 + $0xb0] sm:$0xff]
      %v289 = vld [vmem:[%s249 + $0xb8] sm:$0xff]
      %v290 = vld [vmem:[%s249 + $0xc0] sm:$0xff]
      %v291 = vld [vmem:[%s249 + $0xc8] sm:$0xff]
      %v292 = vld [vmem:[%s249 + $0xd0] sm:$0xff]
      %v293 = vld [vmem:[%s249 + $0xd8] sm:$0xff]
      %v294 = vld [vmem:[%s249 + $0xe0] sm:$0xff]
      %v295 = vld [vmem:[%s249 + $0xe8] sm:$0xff]
      %v296 = vld [vmem:[%s249 + $0xf0] sm:$0xff]
      %v297 = vld [vmem:[%s249 + $0xf8] sm:$0xff]
      %v298 = vld [vmem:[%s3] sm:$0xf]
      %v299 = vld [vmem:[%s3 + $0x4] sm:$0xf]
      %v300 = vld [vmem:[%s3 + $0x8] sm:$0xf]
      %v301 = vld [vmem:[%s3 + $0xc] sm:$0xf]
      %v302 = vld [vmem:[%s3 + $0x10] sm:$0xf]
      %v303 = vld [vmem:[%s3 + $0x14] sm:$0xf]
      %v304 = vld [vmem:[%s3 + $0x18] sm:$0xf]
      %v305 = vld [vmem:[%s3 + $0x1c] sm:$0xf]
      %v306 = vld [vmem:[%s3 + $0x20] sm:$0xf]
      %v307 = vld [vmem:[%s3 + $0x24] sm:$0xf]
      %v308 = vld [vmem:[%s3 + $0x28] sm:$0xf]
      %v309 = vld [vmem:[%s3 + $0x2c] sm:$0xf]
      %v310 = vld [vmem:[%s3 + $0x30] sm:$0xf]
      %v311 = vld [vmem:[%s3 + $0x34] sm:$0xf]
      %v312 = vld [vmem:[%s3 + $0x38] sm:$0xf]
      %v313 = vld [vmem:[%s3 + $0x3c] sm:$0xf]
      %v314 = vld [vmem:[%s3 + $0x40] sm:$0xf]
      %v315 = vld [vmem:[%s3 + $0x44] sm:$0xf]
      %v316 = vld [vmem:[%s4] sm:$0x1]
      %v317 = vlaneseq
      %v318 = vshrl.u32 %v317, 7
      %v319 = vsub.s32 0, %v318
      %v320 = vrot.slane %v316, %v319
      %v353 = vunpack.c.l.b16 %v266
      %v354 = vunpack.c.h.b16 %v266
      %v355 = vunpack.c.l.b16 %v267
      %v356 = vunpack.c.h.b16 %v267
      %v357 = vunpack.c.l.b16 %v268
      %v358 = vunpack.c.h.b16 %v268
      %v359 = vunpack.c.l.b16 %v269
      %v360 = vunpack.c.h.b16 %v269
      %v361 = vunpack.c.l.b16 %v270
      %v362 = vunpack.c.h.b16 %v270
      %v363 = vunpack.c.l.b16 %v271
      %v364 = vunpack.c.h.b16 %v271
      %v365 = vunpack.c.l.b16 %v272
      %v366 = vunpack.c.h.b16 %v272
      %v367 = vunpack.c.l.b16 %v273
      %v368 = vunpack.c.h.b16 %v273
      %v369 = vunpack.c.l.b16 %v274
      %v370 = vunpack.c.h.b16 %v274
      %v371 = vunpack.c.l.b16 %v275
      %v372 = vunpack.c.h.b16 %v275
      %v373 = vunpack.c.l.b16 %v276
      %v374 = vunpack.c.h.b16 %v276
      %v375 = vunpack.c.l.b16 %v277
      %v376 = vunpack.c.h.b16 %v277
      %v377 = vunpack.c.l.b16 %v278
      %v378 = vunpack.c.h.b16 %v278
      %v379 = vunpack.c.l.b16 %v279
      %v380 = vunpack.c.h.b16 %v279
      %v381 = vunpack.c.l.b16 %v280
      %v382 = vunpack.c.h.b16 %v280
      %v383 = vunpack.c.l.b16 %v281
      %v384 = vunpack.c.h.b16 %v281
      %v385 = vunpack.c.l.b16 %v282
      %v386 = vunpack.c.h.b16 %v282
      %v387 = vunpack.c.l.b16 %v283
      %v388 = vunpack.c.h.b16 %v283
      %v389 = vunpack.c.l.b16 %v284
      %v390 = vunpack.c.h.b16 %v284
      %v391 = vunpack.c.l.b16 %v285
      %v392 = vunpack.c.h.b16 %v285
      %v393 = vunpack.c.l.b16 %v286
      %v394 = vunpack.c.h.b16 %v286
      %v395 = vunpack.c.l.b16 %v287
      %v396 = vunpack.c.h.b16 %v287
      %v397 = vunpack.c.l.b16 %v288
      %v398 = vunpack.c.h.b16 %v288
      %v399 = vunpack.c.l.b16 %v289
      %v400 = vunpack.c.h.b16 %v289
      %v401 = vunpack.c.l.b16 %v290
      %v402 = vunpack.c.h.b16 %v290
      %v403 = vunpack.c.l.b16 %v291
      %v404 = vunpack.c.h.b16 %v291
      %v405 = vunpack.c.l.b16 %v292
      %v406 = vunpack.c.h.b16 %v292
      %v407 = vunpack.c.l.b16 %v293
      %v408 = vunpack.c.h.b16 %v293
      %v409 = vunpack.c.l.b16 %v294
      %v410 = vunpack.c.h.b16 %v294
      %v411 = vunpack.c.l.b16 %v295
      %v412 = vunpack.c.h.b16 %v295
      %v413 = vunpack.c.l.b16 %v296
      %v414 = vunpack.c.h.b16 %v296
      %v415 = vunpack.c.l.b16 %v297
      %v416 = vunpack.c.h.b16 %v297
      %v417 = vpack.c.b16 %v355, %v353
      %v418 = vpack.c.b16 %v356, %v354
      %v419 = vpack.c.b16 %v359, %v357
      %v420 = vpack.c.b16 %v360, %v358
      %v421 = vpack.c.b16 %v363, %v361
      %v422 = vpack.c.b16 %v364, %v362
      %v423 = vpack.c.b16 %v367, %v365
      %v424 = vpack.c.b16 %v368, %v366
      %v425 = vpack.c.b16 %v371, %v369
      %v426 = vpack.c.b16 %v372, %v370
      %v427 = vpack.c.b16 %v375, %v373
      %v428 = vpack.c.b16 %v376, %v374
      %v429 = vpack.c.b16 %v379, %v377
      %v430 = vpack.c.b16 %v380, %v378
      %v431 = vpack.c.b16 %v383, %v381
      %v432 = vpack.c.b16 %v384, %v382
      %v433 = vpack.c.b16 %v387, %v385
      %v434 = vpack.c.b16 %v388, %v386
      %v435 = vpack.c.b16 %v391, %v389
      %v436 = vpack.c.b16 %v392, %v390
      %v437 = vpack.c.b16 %v395, %v393
      %v438 = vpack.c.b16 %v396, %v394
      %v439 = vpack.c.b16 %v399, %v397
      %v440 = vpack.c.b16 %v400, %v398
      %v441 = vpack.c.b16 %v403, %v401
      %v442 = vpack.c.b16 %v404, %v402
      %v443 = vpack.c.b16 %v407, %v405
      %v444 = vpack.c.b16 %v408, %v406
      %v445 = vpack.c.b16 %v411, %v409
      %v446 = vpack.c.b16 %v412, %v410
      %v447 = vpack.c.b16 %v415, %v413
      %v448 = vpack.c.b16 %v416, %v414
      %v483 = vunpack.c.l.b16 %v298
      %v484 = vunpack.c.l.b16 %v299
      %v485 = vunpack.c.l.b16 %v300
      %v486 = vunpack.c.l.b16 %v301
      %v487 = vunpack.c.l.b16 %v302
      %v488 = vunpack.c.l.b16 %v303
      %v489 = vunpack.c.l.b16 %v304
      %v490 = vunpack.c.l.b16 %v305
      %v491 = vunpack.c.l.b16 %v306
      %v492 = vunpack.c.l.b16 %v307
      %v493 = vunpack.c.l.b16 %v308
      %v494 = vunpack.c.l.b16 %v309
      %v495 = vunpack.c.l.b16 %v310
      %v496 = vunpack.c.l.b16 %v311
      %v497 = vunpack.c.l.b16 %v312
      %v498 = vunpack.c.l.b16 %v313
      %v499 = vunpack.c.l.b16 %v314
      %v500 = vunpack.c.l.b16 %v315
      %v501 = vpack.c.b16 %v484, %v483
      %v502 = vpack.c.b16 %v486, %v485
      %v503 = vpack.c.b16 %v488, %v487
      %v504 = vpack.c.b16 %v490, %v489
      %v505 = vpack.c.b16 %v492, %v491
      %v506 = vpack.c.b16 %v494, %v493
      %v507 = vpack.c.b16 %v496, %v495
      %v508 = vpack.c.b16 %v498, %v497
      %v509 = vpack.c.b16 %v500, %v499
      %vm519 = vcmask 130048
      %v521 = vsel %vm519, %v418, 0
      %v524 = vsel %vm519, %v420, 0
      %v527 = vsel %vm519, %v422, 0
      %v530 = vsel %vm519, %v424, 0
      %v533 = vsel %vm519, %v426, 0
      %v536 = vsel %vm519, %v428, 0
      %v539 = vsel %vm519, %v430, 0
      %v542 = vsel %vm519, %v432, 0
      %v545 = vsel %vm519, %v434, 0
      %v548 = vsel %vm519, %v436, 0
      %v551 = vsel %vm519, %v438, 0
      %v554 = vsel %vm519, %v440, 0
      %v557 = vsel %vm519, %v442, 0
      %v560 = vsel %vm519, %v444, 0
      %v563 = vsel %vm519, %v446, 0
      %v566 = vsel %vm519, %v448, 0
      %568 = vmatprep.subr.bf16.mxu0 0
      %569 = vmatpush1.bf16.msra.mxu0 %v501
      %570 = vmatprep.subr.bf16.mxu0 0
      %571 = vmatpush1.bf16.msra.mxu0 %v502
      %572 = vmatprep.subr.bf16.mxu0 0
      %573 = vmatpush1.bf16.msra.mxu0 %v503
      %574 = vmatprep.subr.bf16.mxu0 0
      %575 = vmatpush1.bf16.msra.mxu0 %v504
      %576 = vmatprep.subr.bf16.mxu0 0
      %577 = vmatpush1.bf16.msra.mxu0 %v505
      %578 = vmatprep.subr.bf16.mxu0 0
      %579 = vmatpush1.bf16.msra.mxu0 %v506
      %580 = vmatprep.subr.bf16.mxu0 0
      %581 = vmatpush1.bf16.msra.mxu0 %v507
      %582 = vmatprep.subr.bf16.mxu0 0
      %583 = vmatpush1.bf16.msra.mxu0 %v508
      %584 = vmatprep.subr.bf16.mxu0 0
      %585 = vmatpush1.bf16.msra.mxu0 %v509
      %586 = vmatprep.subr.bf16.mxu0 0
      %587 = vmatpush1.bf16.msra.mxu0 0
      %588 = vmatprep.subr.bf16.mxu0 0
      %589 = vmatpush1.bf16.msra.mxu0 0
      %590 = vmatprep.subr.bf16.mxu0 0
      %591 = vmatpush1.bf16.msra.mxu0 0
      %592 = vmatprep.subr.bf16.mxu0 0
      %593 = vmatpush1.bf16.msra.mxu0 0
      %594 = vmatprep.subr.bf16.mxu0 0
      %595 = vmatpush1.bf16.msra.mxu0 0
      %596 = vmatprep.subr.bf16.mxu0 0
      %597 = vmatpush1.bf16.msra.mxu0 0
      %598 = vmatprep.subr.bf16.mxu0 0
      %599 = vmatpush1.bf16.msra.mxu0 0
      %600 = vmatprep.mubr.bf16.mxu0 %v521
      %601 = vmatmul.mubr.bf16.gmra.mrb[0].mxu0 %v417
      %v602 = vpop.f32.mrb[0].mxu0
      %v603 = vadd.f32 %v320, %v602
      %v604 = vpop.f32.mrb[0].mxu0
      %v605 = vpop.f32.mrb[0].mxu0
      %v606 = vadd.f32 %v320, %v605
      %v607 = vpop.f32.mrb[0].mxu0
      %608 = vmatprep.mubr.bf16.mxu0 %v524
      %609 = vmatmul.mubr.bf16.gmra.mrb[0].mxu0 %v419
      %v610 = vpop.f32.mrb[0].mxu0
      %v611 = vadd.f32 %v320, %v610
      %v612 = vpop.f32.mrb[0].mxu0
      %v613 = vpop.f32.mrb[0].mxu0
      %v614 = vadd.f32 %v320, %v613
      %v615 = vpop.f32.mrb[0].mxu0
      %616 = vmatprep.mubr.bf16.mxu0 %v527
      %617 = vmatmul.mubr.bf16.gmra.mrb[0].mxu0 %v421
      %v618 = vpop.f32.mrb[0].mxu0
      %v619 = vadd.f32 %v320, %v618
      %v620 = vpop.f32.mrb[0].mxu0
      %v621 = vpop.f32.mrb[0].mxu0
      %v622 = vadd.f32 %v320, %v621
      %v623 = vpop.f32.mrb[0].mxu0
      %624 = vmatprep.mubr.bf16.mxu0 %v530
      %625 = vmatmul.mubr.bf16.gmra.mrb[0].mxu0 %v423
      %v626 = vpop.f32.mrb[0].mxu0
      %v627 = vadd.f32 %v320, %v626
      %v628 = vpop.f32.mrb[0].mxu0
      %v629 = vpop.f32.mrb[0].mxu0
      %v630 = vadd.f32 %v320, %v629
      %v631 = vpop.f32.mrb[0].mxu0
      %632 = vmatprep.mubr.bf16.mxu0 %v533
      %633 = vmatmul.mubr.bf16.gmra.mrb[0].mxu0 %v425
      %v634 = vpop.f32.mrb[0].mxu0
      %v635 = vadd.f32 %v320, %v634
      %v636 = vpop.f32.mrb[0].mxu0
      %v637 = vpop.f32.mrb[0].mxu0
      %v638 = vadd.f32 %v320, %v637
      %v639 = vpop.f32.mrb[0].mxu0
      %640 = vmatprep.mubr.bf16.mxu0 %v536
      %641 = vmatmul.mubr.bf16.gmra.mrb[0].mxu0 %v427
      %v642 = vpop.f32.mrb[0].mxu0
      %v643 = vadd.f32 %v320, %v642
      %v644 = vpop.f32.mrb[0].mxu0
      %v645 = vpop.f32.mrb[0].mxu0
      %v646 = vadd.f32 %v320, %v645
      %v647 = vpop.f32.mrb[0].mxu0
      %648 = vmatprep.mubr.bf16.mxu0 %v539
      %649 = vmatmul.mubr.bf16.gmra.mrb[0].mxu0 %v429
      %v650 = vpop.f32.mrb[0].mxu0
      %v651 = vadd.f32 %v320, %v650
      %v652 = vpop.f32.mrb[0].mxu0
      %v653 = vpop.f32.mrb[0].mxu0
      %v654 = vadd.f32 %v320, %v653
      %v655 = vpop.f32.mrb[0].mxu0
      %656 = vmatprep.mubr.bf16.mxu0 %v542
      %657 = vmatmul.mubr.bf16.gmra.mrb[0].mxu0 %v431
      %v658 = vpop.f32.mrb[0].mxu0
      %v659 = vadd.f32 %v320, %v658
      %v660 = vpop.f32.mrb[0].mxu0
      %v661 = vpop.f32.mrb[0].mxu0
      %v662 = vadd.f32 %v320, %v661
      %v663 = vpop.f32.mrb[0].mxu0
      %664 = vmatprep.mubr.bf16.mxu0 %v545
      %665 = vmatmul.mubr.bf16.gmra.mrb[0].mxu0 %v433
      %v666 = vpop.f32.mrb[0].mxu0
      %v667 = vadd.f32 %v320, %v666
      %v668 = vpop.f32.mrb[0].mxu0
      %v669 = vpop.f32.mrb[0].mxu0
      %v670 = vadd.f32 %v320, %v669
      %v671 = vpop.f32.mrb[0].mxu0
      %672 = vmatprep.mubr.bf16.mxu0 %v548
      %673 = vmatmul.mubr.bf16.gmra.mrb[0].mxu0 %v435
      %v674 = vpop.f32.mrb[0].mxu0
      %v675 = vadd.f32 %v320, %v674
      %v676 = vpop.f32.mrb[0].mxu0
      %v677 = vpop.f32.mrb[0].mxu0
      %v678 = vadd.f32 %v320, %v677
      %v679 = vpop.f32.mrb[0].mxu0
      %680 = vmatprep.mubr.bf16.mxu0 %v551
      %681 = vmatmul.mubr.bf16.gmra.mrb[0].mxu0 %v437
      %v682 = vpop.f32.mrb[0].mxu0
      %v683 = vadd.f32 %v320, %v682
      %v684 = vpop.f32.mrb[0].mxu0
      %v685 = vpop.f32.mrb[0].mxu0
      %v686 = vadd.f32 %v320, %v685
      %v687 = vpop.f32.mrb[0].mxu0
      %688 = vmatprep.mubr.bf16.mxu0 %v554
      %689 = vmatmul.mubr.bf16.gmra.mrb[0].mxu0 %v439
      %v690 = vpop.f32.mrb[0].mxu0
      %v691 = vadd.f32 %v320, %v690
      %v692 = vpop.f32.mrb[0].mxu0
      %v693 = vpop.f32.mrb[0].mxu0
      %v694 = vadd.f32 %v320, %v693
      %v695 = vpop.f32.mrb[0].mxu0
      %696 = vmatprep.mubr.bf16.mxu0 %v557
      %697 = vmatmul.mubr.bf16.gmra.mrb[0].mxu0 %v441
      %v698 = vpop.f32.mrb[0].mxu0
      %v699 = vadd.f32 %v320, %v698
      %v700 = vpop.f32.mrb[0].mxu0
      %v701 = vpop.f32.mrb[0].mxu0
      %v702 = vadd.f32 %v320, %v701
      %v703 = vpop.f32.mrb[0].mxu0
      %704 = vmatprep.mubr.bf16.mxu0 %v560
      %705 = vmatmul.mubr.bf16.gmra.mrb[0].mxu0 %v443
      %v706 = vpop.f32.mrb[0].mxu0
      %v707 = vadd.f32 %v320, %v706
      %v708 = vpop.f32.mrb[0].mxu0
      %v709 = vpop.f32.mrb[0].mxu0
      %v710 = vadd.f32 %v320, %v709
      %v711 = vpop.f32.mrb[0].mxu0
      %712 = vmatprep.mubr.bf16.mxu0 %v563
      %713 = vmatmul.mubr.bf16.gmra.mrb[0].mxu0 %v445
      %v714 = vpop.f32.mrb[0].mxu0
      %v715 = vadd.f32 %v320, %v714
      %v716 = vpop.f32.mrb[0].mxu0
      %v717 = vpop.f32.mrb[0].mxu0
      %v718 = vadd.f32 %v320, %v717
      %v719 = vpop.f32.mrb[0].mxu0
      %720 = vmatprep.mubr.bf16.mxu0 %v566
      %721 = vmatmul.mubr.bf16.gmra.mrb[0].mxu0 %v447
      %v722 = vpop.f32.mrb[0].mxu0
      %v723 = vadd.f32 %v320, %v722
      %v724 = vpop.f32.mrb[0].mxu0
      %v725 = vpop.f32.mrb[0].mxu0
      %v726 = vadd.f32 %v320, %v725
      %v727 = vpop.f32.mrb[0].mxu0
      %728 = vdwg.mxu0
      %729 = vst.msk [vmem:[%s264] sm:$0xff] %vm519, %v603
      %730 = vst.msk [vmem:[%s264 + $0x8] sm:$0xff] %vm519, %v606
      %731 = vst.msk [vmem:[%s264 + $0x10] sm:$0xff] %vm519, %v611
      %732 = vst.msk [vmem:[%s264 + $0x18] sm:$0xff] %vm519, %v614
      %733 = vst.msk [vmem:[%s264 + $0x20] sm:$0xff] %vm519, %v619
      %734 = vst.msk [vmem:[%s264 + $0x28] sm:$0xff] %vm519, %v622
      %735 = vst.msk [vmem:[%s264 + $0x30] sm:$0xff] %vm519, %v627
      %736 = vst.msk [vmem:[%s264 + $0x38] sm:$0xff] %vm519, %v630
      %737 = vst.msk [vmem:[%s264 + $0x40] sm:$0xff] %vm519, %v635
      %738 = vst.msk [vmem:[%s264 + $0x48] sm:$0xff] %vm519, %v638
      %739 = vst.msk [vmem:[%s264 + $0x50] sm:$0xff] %vm519, %v643
      %740 = vst.msk [vmem:[%s264 + $0x58] sm:$0xff] %vm519, %v646
      %741 = vst.msk [vmem:[%s264 + $0x60] sm:$0xff] %vm519, %v651
      %742 = vst.msk [vmem:[%s264 + $0x68] sm:$0xff] %vm519, %v654
      %743 = vst.msk [vmem:[%s264 + $0x70] sm:$0xff] %vm519, %v659
      %744 = vst.msk [vmem:[%s264 + $0x78] sm:$0xff] %vm519, %v662
      %745 = vst.msk [vmem:[%s264 + $0x80] sm:$0xff] %vm519, %v667
      %746 = vst.msk [vmem:[%s264 + $0x88] sm:$0xff] %vm519, %v670
      %747 = vst.msk [vmem:[%s264 + $0x90] sm:$0xff] %vm519, %v675
      %748 = vst.msk [vmem:[%s264 + $0x98] sm:$0xff] %vm519, %v678
      %749 = vst.msk [vmem:[%s264 + $0xa0] sm:$0xff] %vm519, %v683
      %750 = vst.msk [vmem:[%s264 + $0xa8] sm:$0xff] %vm519, %v686
      %751 = vst.msk [vmem:[%s264 + $0xb0] sm:$0xff] %vm519, %v691
      %752 = vst.msk [vmem:[%s264 + $0xb8] sm:$0xff] %vm519, %v694
      %753 = vst.msk [vmem:[%s264 + $0xc0] sm:$0xff] %vm519, %v699
      %754 = vst.msk [vmem:[%s264 + $0xc8] sm:$0xff] %vm519, %v702
      %755 = vst.msk [vmem:[%s264 + $0xd0] sm:$0xff] %vm519, %v707
      %756 = vst.msk [vmem:[%s264 + $0xd8] sm:$0xff] %vm519, %v710
      %757 = vst.msk [vmem:[%s264 + $0xe0] sm:$0xff] %vm519, %v715
      %758 = vst.msk [vmem:[%s264 + $0xe8] sm:$0xff] %vm519, %v718
      %759 = vst.msk [vmem:[%s264 + $0xf0] sm:$0xff] %vm519, %v723
      %760 = vst.msk [vmem:[%s264 + $0xf8] sm:$0xff] %vm519, %v726
      %v761 = vld [vmem:[%s254] sm:$0xff]
      %v762 = vld [vmem:[%s254 + $0x8] sm:$0xff]
      %v763 = vld [vmem:[%s254 + $0x10] sm:$0xff]
      %v764 = vld [vmem:[%s254 + $0x18] sm:$0xff]
      %s765 = scalar_lea.vmem %s3, 72
      %v766 = vld [vmem:[%s765] sm:$0xf]
      %v767 = vld [vmem:[%s765 + $0x4] sm:$0xf]
      %v768 = vld [vmem:[%s765 + $0x8] sm:$0xf]
      %v769 = vld [vmem:[%s765 + $0xc] sm:$0xf]
      %v770 = vld [vmem:[%s765 + $0x10] sm:$0xf]
      %v771 = vld [vmem:[%s765 + $0x14] sm:$0xf]
      %v772 = vld [vmem:[%s765 + $0x18] sm:$0xf]
      %v773 = vld [vmem:[%s765 + $0x1c] sm:$0xf]
      %v774 = vld [vmem:[%s765 + $0x20] sm:$0xf]
      %v775 = vld [vmem:[%s765 + $0x24] sm:$0xf]
      %v776 = vld [vmem:[%s765 + $0x28] sm:$0xf]
      %v777 = vld [vmem:[%s765 + $0x2c] sm:$0xf]
      %v778 = vld [vmem:[%s765 + $0x30] sm:$0xf]
      %v779 = vld [vmem:[%s765 + $0x34] sm:$0xf]
      %v780 = vld [vmem:[%s765 + $0x38] sm:$0xf]
      %v781 = vld [vmem:[%s765 + $0x3c] sm:$0xf]
      %v782 = vld [vmem:[%s765 + $0x40] sm:$0xf]
      %v783 = vld [vmem:[%s765 + $0x44] sm:$0xf]
      %v784 = vld [vmem:[%s4 + $0x1] sm:$0x1]
      %v785 = vlaneseq
      %v786 = vshrl.u32 %v785, 7
      %v787 = vsub.s32 0, %v786
      %v788 = vrot.slane %v784, %v787
      %v793 = vunpack.c.l.b16 %v761
      %v794 = vunpack.c.h.b16 %v761
      %v795 = vunpack.c.l.b16 %v762
      %v796 = vunpack.c.h.b16 %v762
      %v797 = vunpack.c.l.b16 %v763
      %v798 = vunpack.c.h.b16 %v763
      %v799 = vunpack.c.l.b16 %v764
      %v800 = vunpack.c.h.b16 %v764
      %v801 = vpack.c.b16 %v795, %v793
      %v802 = vpack.c.b16 %v796, %v794
      %v803 = vpack.c.b16 %v799, %v797
      %v804 = vpack.c.b16 %v800, %v798
      %v825 = vunpack.c.l.b16 %v766
      %v826 = vunpack.c.l.b16 %v767
      %v827 = vunpack.c.l.b16 %v768
      %v828 = vunpack.c.l.b16 %v769
      %v829 = vunpack.c.l.b16 %v770
      %v830 = vunpack.c.l.b16 %v771
      %v831 = vunpack.c.l.b16 %v772
      %v832 = vunpack.c.l.b16 %v773
      %v833 = vunpack.c.l.b16 %v774
      %v834 = vunpack.c.l.b16 %v775
      %v835 = vunpack.c.l.b16 %v776
      %v836 = vunpack.c.l.b16 %v777
      %v837 = vunpack.c.l.b16 %v778
      %v838 = vunpack.c.l.b16 %v779
      %v839 = vunpack.c.l.b16 %v780
      %v840 = vunpack.c.l.b16 %v781
      %v841 = vunpack.c.l.b16 %v782
      %v842 = vunpack.c.l.b16 %v783
      %v843 = vpack.c.b16 %v826, %v825
      %v844 = vpack.c.b16 %v828, %v827
      %v845 = vpack.c.b16 %v830, %v829
      %v846 = vpack.c.b16 %v832, %v831
      %v847 = vpack.c.b16 %v834, %v833
      %v848 = vpack.c.b16 %v836, %v835
      %v849 = vpack.c.b16 %v838, %v837
      %v850 = vpack.c.b16 %v840, %v839
      %v851 = vpack.c.b16 %v842, %v841
      %v862 = vsel %vm519, %v802, 0
      %v865 = vsel %vm519, %v804, 0
      %867 = vmatprep.subr.bf16.mxu0 0
      %868 = vmatpush1.bf16.msra.mxu0 %v843
      %869 = vmatprep.subr.bf16.mxu0 0
      %870 = vmatpush1.bf16.msra.mxu0 %v844
      %871 = vmatprep.subr.bf16.mxu0 0
      %872 = vmatpush1.bf16.msra.mxu0 %v845
      %873 = vmatprep.subr.bf16.mxu0 0
      %874 = vmatpush1.bf16.msra.mxu0 %v846
      %875 = vmatprep.subr.bf16.mxu0 0
      %876 = vmatpush1.bf16.msra.mxu0 %v847
      %877 = vmatprep.subr.bf16.mxu0 0
      %878 = vmatpush1.bf16.msra.mxu0 %v848
      %879 = vmatprep.subr.bf16.mxu0 0
      %880 = vmatpush1.bf16.msra.mxu0 %v849
      %881 = vmatprep.subr.bf16.mxu0 0
      %882 = vmatpush1.bf16.msra.mxu0 %v850
      %883 = vmatprep.subr.bf16.mxu0 0
      %884 = vmatpush1.bf16.msra.mxu0 %v851
      %885 = vmatprep.subr.bf16.mxu0 0
      %886 = vmatpush1.bf16.msra.mxu0 0
      %887 = vmatprep.subr.bf16.mxu0 0
      %888 = vmatpush1.bf16.msra.mxu0 0
      %889 = vmatprep.subr.bf16.mxu0 0
      %890 = vmatpush1.bf16.msra.mxu0 0
      %891 = vmatprep.subr.bf16.mxu0 0
      %892 = vmatpush1.bf16.msra.mxu0 0
      %893 = vmatprep.subr.bf16.mxu0 0
      %894 = vmatpush1.bf16.msra.mxu0 0
      %895 = vmatprep.subr.bf16.mxu0 0
      %896 = vmatpush1.bf16.msra.mxu0 0
      %897 = vmatprep.subr.bf16.mxu0 0
      %898 = vmatpush1.bf16.msra.mxu0 0
      %899 = vmatprep.mubr.bf16.mxu0 %v862
      %900 = vmatmul.mubr.bf16.gmra.mrb[0].mxu0 %v801
      %v901 = vpop.f32.mrb[0].mxu0
      %v902 = vadd.f32 %v788, %v901
      %v903 = vpop.f32.mrb[0].mxu0
      %v904 = vpop.f32.mrb[0].mxu0
      %v905 = vadd.f32 %v788, %v904
      %v906 = vpop.f32.mrb[0].mxu0
      %907 = vmatprep.mubr.bf16.mxu0 %v865
      %908 = vmatmul.mubr.bf16.gmra.mrb[0].mxu0 %v803
      %v909 = vpop.f32.mrb[0].mxu0
      %v910 = vadd.f32 %v788, %v909
      %v911 = vpop.f32.mrb[0].mxu0
      %v912 = vpop.f32.mrb[0].mxu0
      %v913 = vadd.f32 %v788, %v912
      %v914 = vpop.f32.mrb[0].mxu0
      %915 = vdwg.mxu0
      %916 = vst.msk [vmem:[%s264 + $0x100] sm:$0xff] %vm519, %v902
      %917 = vst.msk [vmem:[%s264 + $0x108] sm:$0xff] %vm519, %v905
      %918 = vst.msk [vmem:[%s264 + $0x110] sm:$0xff] %vm519, %v910
      %919 = vst.msk [vmem:[%s264 + $0x118] sm:$0xff] %vm519, %v913
      %v920 = vld [vmem:[%s259] sm:$0xff]
      %v921 = vld [vmem:[%s259 + $0x8] sm:$0xff]
      %v922 = vld [vmem:[%s259 + $0x10] sm:$0xff]
      %v923 = vld [vmem:[%s259 + $0x18] sm:$0xff]
      %s924 = scalar_lea.vmem %s3, 144
      %v925 = vld [vmem:[%s924] sm:$0xf]
      %v926 = vld [vmem:[%s924 + $0x4] sm:$0xf]
      %v927 = vld [vmem:[%s924 + $0x8] sm:$0xf]
      %v928 = vld [vmem:[%s924 + $0xc] sm:$0xf]
      %v929 = vld [vmem:[%s924 + $0x10] sm:$0xf]
      %v930 = vld [vmem:[%s924 + $0x14] sm:$0xf]
      %v931 = vld [vmem:[%s924 + $0x18] sm:$0xf]
      %v932 = vld [vmem:[%s924 + $0x1c] sm:$0xf]
      %v933 = vld [vmem:[%s924 + $0x20] sm:$0xf]
      %v934 = vld [vmem:[%s924 + $0x24] sm:$0xf]
      %v935 = vld [vmem:[%s924 + $0x28] sm:$0xf]
      %v936 = vld [vmem:[%s924 + $0x2c] sm:$0xf]
      %v937 = vld [vmem:[%s924 + $0x30] sm:$0xf]
      %v938 = vld [vmem:[%s924 + $0x34] sm:$0xf]
      %v939 = vld [vmem:[%s924 + $0x38] sm:$0xf]
      %v940 = vld [vmem:[%s924 + $0x3c] sm:$0xf]
      %v941 = vld [vmem:[%s924 + $0x40] sm:$0xf]
      %v942 = vld [vmem:[%s924 + $0x44] sm:$0xf]
      %v943 = vld [vmem:[%s4 + $0x2] sm:$0x1]
      %v944 = vlaneseq
      %v945 = vshrl.u32 %v944, 7
      %v946 = vsub.s32 0, %v945
      %v947 = vrot.slane %v943, %v946
      %v952 = vunpack.c.l.b16 %v920
      %v953 = vunpack.c.h.b16 %v920
      %v954 = vunpack.c.l.b16 %v921
      %v955 = vunpack.c.h.b16 %v921
      %v956 = vunpack.c.l.b16 %v922
      %v957 = vunpack.c.h.b16 %v922
      %v958 = vunpack.c.l.b16 %v923
      %v959 = vunpack.c.h.b16 %v923
      %v960 = vpack.c.b16 %v954, %v952
      %v961 = vpack.c.b16 %v955, %v953
      %v962 = vpack.c.b16 %v958, %v956
      %v963 = vpack.c.b16 %v959, %v957
      %v984 = vunpack.c.l.b16 %v925
      %v985 = vunpack.c.l.b16 %v926
      %v986 = vunpack.c.l.b16 %v927
      %v987 = vunpack.c.l.b16 %v928
      %v988 = vunpack.c.l.b16 %v929
      %v989 = vunpack.c.l.b16 %v930
      %v990 = vunpack.c.l.b16 %v931
      %v991 = vunpack.c.l.b16 %v932
      %v992 = vunpack.c.l.b16 %v933
      %v993 = vunpack.c.l.b16 %v934
      %v994 = vunpack.c.l.b16 %v935
      %v995 = vunpack.c.l.b16 %v936
      %v996 = vunpack.c.l.b16 %v937
      %v997 = vunpack.c.l.b16 %v938
      %v998 = vunpack.c.l.b16 %v939
      %v999 = vunpack.c.l.b16 %v940
      %v1000 = vunpack.c.l.b16 %v941
      %v1001 = vunpack.c.l.b16 %v942
      %v1002 = vpack.c.b16 %v985, %v984
      %v1003 = vpack.c.b16 %v987, %v986
      %v1004 = vpack.c.b16 %v989, %v988
      %v1005 = vpack.c.b16 %v991, %v990
      %v1006 = vpack.c.b16 %v993, %v992
      %v1007 = vpack.c.b16 %v995, %v994
      %v1008 = vpack.c.b16 %v997, %v996
      %v1009 = vpack.c.b16 %v999, %v998
      %v1010 = vpack.c.b16 %v1001, %v1000
      %v1021 = vsel %vm519, %v961, 0
      %v1024 = vsel %vm519, %v963, 0
      %1026 = vmatprep.subr.bf16.mxu0 0
      %1027 = vmatpush1.bf16.msra.mxu0 %v1002
      %1028 = vmatprep.subr.bf16.mxu0 0
      %1029 = vmatpush1.bf16.msra.mxu0 %v1003
      %1030 = vmatprep.subr.bf16.mxu0 0
      %1031 = vmatpush1.bf16.msra.mxu0 %v1004
      %1032 = vmatprep.subr.bf16.mxu0 0
      %1033 = vmatpush1.bf16.msra.mxu0 %v1005
      %1034 = vmatprep.subr.bf16.mxu0 0
      %1035 = vmatpush1.bf16.msra.mxu0 %v1006
      %1036 = vmatprep.subr.bf16.mxu0 0
      %1037 = vmatpush1.bf16.msra.mxu0 %v1007
      %1038 = vmatprep.subr.bf16.mxu0 0
      %1039 = vmatpush1.bf16.msra.mxu0 %v1008
      %1040 = vmatprep.subr.bf16.mxu0 0
      %1041 = vmatpush1.bf16.msra.mxu0 %v1009
      %1042 = vmatprep.subr.bf16.mxu0 0
      %1043 = vmatpush1.bf16.msra.mxu0 %v1010
      %1044 = vmatprep.subr.bf16.mxu0 0
      %1045 = vmatpush1.bf16.msra.mxu0 0
      %1046 = vmatprep.subr.bf16.mxu0 0
      %1047 = vmatpush1.bf16.msra.mxu0 0
      %1048 = vmatprep.subr.bf16.mxu0 0
      %1049 = vmatpush1.bf16.msra.mxu0 0
      %1050 = vmatprep.subr.bf16.mxu0 0
      %1051 = vmatpush1.bf16.msra.mxu0 0
      %1052 = vmatprep.subr.bf16.mxu0 0
      %1053 = vmatpush1.bf16.msra.mxu0 0
      %1054 = vmatprep.subr.bf16.mxu0 0
      %1055 = vmatpush1.bf16.msra.mxu0 0
      %1056 = vmatprep.subr.bf16.mxu0 0
      %1057 = vmatpush1.bf16.msra.mxu0 0
      %1058 = vmatprep.mubr.bf16.mxu0 %v1021
      %1059 = vmatmul.mubr.bf16.gmra.mrb[0].mxu0 %v960
      %v1060 = vpop.f32.mrb[0].mxu0
      %v1061 = vadd.f32 %v947, %v1060
      %v1062 = vpop.f32.mrb[0].mxu0
      %v1063 = vpop.f32.mrb[0].mxu0
      %v1064 = vadd.f32 %v947, %v1063
      %v1065 = vpop.f32.mrb[0].mxu0
      %1066 = vmatprep.mubr.bf16.mxu0 %v1024
      %1067 = vmatmul.mubr.bf16.gmra.mrb[0].mxu0 %v962
      %v1068 = vpop.f32.mrb[0].mxu0
      %v1069 = vadd.f32 %v947, %v1068
      %v1070 = vpop.f32.mrb[0].mxu0
      %v1071 = vpop.f32.mrb[0].mxu0
      %v1072 = vadd.f32 %v947, %v1071
      %v1073 = vpop.f32.mrb[0].mxu0
      %1074 = vdwg.mxu0
      %1075 = vst.msk [vmem:[%s264 + $0x120] sm:$0xff] %vm519, %v1061
      %1076 = vst.msk [vmem:[%s264 + $0x128] sm:$0xff] %vm519, %v1064
      %1077 = vst.msk [vmem:[%s264 + $0x130] sm:$0xff] %vm519, %v1069
      %1078 = vst.msk [vmem:[%s264 + $0x138] sm:$0xff] %vm519, %v1072
      %p1079 = scmp.lt.s32.totalorder %s16, 1
      %s1080 = scalar_select %p1079, %s16, 1
      %s1081 = smul.addr %s1080, 40
      %s1082 = smul.addr %s1081, 8
      %s1083 = scalar_lea.vmem %s5, %s1082
      // Predicated region
      $region41: #{tpu_custom_call.1} parent=39 // pred_check
        %p1084 = pneg %p154
      $region42: #{tpu_custom_call.1} parent=39 // pred_check_branch
        %1086 = sbr.rel (%p1084) target = $region44
      $region43: #{tpu_custom_call.1} parent=39 // pred_region
        _
      $region44: #{tpu_custom_call.1} parent=39 // pred_fallthru
        _
    $region40: #{tpu_custom_call.1} parent=5 // pred_fallthru
      _
    %p1087 = scmp.le.s32.totalorder 2, %s11
    // Predicated region
    $region45: #{tpu_custom_call.1} parent=5 // pred_check
      %p1088 = pneg %p1087
    $region46: #{tpu_custom_call.1} parent=5 // pred_check_branch
      %1090 = sbr.rel (%p1088) target = $region48
    $region47: #{tpu_custom_call.1} parent=5 // pred_region
      %s1091 = ssub.s32 %s11, 2
      // Predicated region
      $region49: #{tpu_custom_call.1} parent=47 // pred_check
        %p1092 = pneg %p160
      $region50: #{tpu_custom_call.1} parent=47 // pred_check_branch
        %1094 = sbr.rel (%p1092) target = $region52
      $region51: #{tpu_custom_call.1} parent=47 // pred_region
        %p1095 = scmp.lt.s32.totalorder %s17, 1
        %s1096 = scalar_select %p1095, %s17, 1
        %s1097 = smul.addr %s1096, 40
        %s1098 = smul.addr %s1097, 8
        %s1099 = scalar_lea.vmem %s5, %s1098
      $region52: #{tpu_custom_call.1} parent=47 // pred_fallthru
        _
    $region48: #{tpu_custom_call.1} parent=5 // pred_fallthru
      _
  $region6: #{tpu_custom_call.1} parent=0 // loop_footer
    %s15 = sadd.s32 1, %s11
  $region7: #{tpu_custom_call.1} parent=0 // loop_footer_branch
    %10 = sbr.rel target = $region3
  $region8: #{tpu_custom_call.1} parent=0 // loop_exit
    _

</llo_original>
